<compile_context>
chip_gen: v7x
topology: tpu7x:2x2x1
jax: 0.10.0
libtpu: 0.0.40
codegen_flags: <defaults>
</compile_context>

<pallas_src>
import math

import jax
import jax.numpy as jnp
from jax.experimental import pallas as pl
from jax.experimental.pallas import tpu as pltpu


def _round_up(x, m):
    return ((x + m - 1) // m) * m


def _balanced_tile(dim, max_tile, align):
    """Largest aligned tile <= ~max_tile that splits `dim` into equal-ish pieces."""
    n_tiles = max(1, -(-dim // max_tile))          # cdiv(dim, max_tile)
    return _round_up(-(-dim // n_tiles), align)    # round_up(cdiv(dim, n_tiles), align)


def _glu_kernel(x_ref, w_ref, b_ref, o_ref, acc_ref):
    # x_ref:   (tm, tk)          token tile i, K tile k
    # w_ref:   (1, tk, 2*tn)     [W1 | W2] hidden-column tile j, K tile k
    # b_ref:   (1, 1, 2*tn)      [b1 | b2] hidden-column tile j
    # o_ref:   (tm, tn)
    # acc_ref: (tm, 2*tn) f32 scratch, persists across the (innermost) K sweep
    k = pl.program_id(2)

    @pl.when(k == 0)
    def _():
        acc_ref[...] = jnp.zeros_like(acc_ref)

    # Single MXU push per step: (tm, tk) @ (tk, 2*tn), f32 accumulation.
    acc_ref[...] += jnp.dot(x_ref[...], w_ref[0],
                            preferred_element_type=jnp.float32)

    @pl.when(k == pl.num_programs(2) - 1)
    def _():
        tn = o_ref.shape[1]                       # static
        acc = acc_ref[...] + b_ref[0].astype(jnp.float32)
        gate = acc[:, :tn]
        val = acc[:, tn:]
        # sigmoid's exp routes to the EUP slot -> hidden under the MXU work.
        o_ref[...] = (jax.nn.sigmoid(gate) * val).astype(o_ref.dtype)


def glu(x, w1, b1, w2, b2, *, tm=256, tn=512, tk=512, use_bf16=False):
    """GLU forward.

    x:       (..., input_size)
    w1, w2:  (input_size, hidden_size)   (PyTorch nn.Linear weight, transposed)
    b1, b2:  (hidden_size,)
    """
    *lead, n_input = x.shape
    n_hidden = w1.shape[1]
    M = math.prod(lead) if lead else 1

    # --- balanced, hardware-aligned tile sizes ---
    sub_align = 16 if use_bf16 else 8
    tm_eff = _balanced_tile(M, tm, sub_align)      # sublane-aligned token tile
    tn_eff = _balanced_tile(n_hidden, tn, 128)     # lane-aligned hidden tile
    tk_eff = _balanced_tile(n_input, tk, 128)      # lane-aligned K tile

    M_p = _round_up(M, tm_eff)
    H_p = _round_up(n_hidden, tn_eff)
    K_p = _round_up(n_input, tk_eff)
    n_i, n_j, n_k = M_p // tm_eff, H_p // tn_eff, K_p // tk_eff

    op_dtype = jnp.bfloat16 if use_bf16 else x.dtype

    # --- pad / relayout operands (zero K-padding contributes 0 to the dots) ---
    x2d = x.reshape(M, n_input)
    x2d = jnp.pad(x2d, ((0, M_p - M), (0, K_p - n_input))).astype(op_dtype)

    def tile_cols(w):
        # (K, H) -> zero-pad -> (n_j, K_p, tn_eff), hidden-column-tile major.
        wp = jnp.pad(w, ((0, K_p - n_input), (0, H_p - n_hidden)))
        return wp.reshape(K_p, n_j, tn_eff).transpose(1, 0, 2)

    def tile_bias(b):
        bp = jnp.pad(b.reshape(1, n_hidden), ((0, 0), (0, H_p - n_hidden)))
        return bp.reshape(1, n_j, tn_eff).transpose(1, 0, 2)

    # [W1 | W2] / [b1 | b2] concatenated per hidden tile -> one stream each.
    w_cat = jnp.concatenate([tile_cols(w1), tile_cols(w2)], axis=-1).astype(op_dtype)
    b_cat = jnp.concatenate([tile_bias(b1), tile_bias(b2)], axis=-1).astype(jnp.float32)

    # --- generation-aware VMEM budget (~75% of physical capacity) ---
    try:
        vmem_cap = pltpu.get_tpu_info().vmem_capacity_bytes
    except Exception:  # conservative fallback if the query is unavailable
        vmem_cap = 64 << 20
    vmem_limit = int(0.75 * vmem_cap)

    out2d = pl.pallas_call(
        _glu_kernel,
        out_shape=jax.ShapeDtypeStruct((M_p, H_p), x.dtype),
        grid_spec=pltpu.PrefetchScalarGridSpec(
            num_scalar_prefetch=0,
            # (tokens, hidden columns, K) — K innermost so the accumulator
            # pattern holds; i/j are independent (megacore-shardable).
            grid=(n_i, n_j, n_k),
            in_specs=[
                pl.BlockSpec((tm_eff, tk_eff), lambda i, j, k: (i, k)),
                pl.BlockSpec((1, tk_eff, 2 * tn_eff), lambda i, j, k: (j, k, 0)),
                pl.BlockSpec((1, 1, 2 * tn_eff), lambda i, j, k: (j, 0, 0)),
            ],
            out_specs=pl.BlockSpec((tm_eff, tn_eff), lambda i, j, k: (i, j)),
            scratch_shapes=[pltpu.VMEM((tm_eff, 2 * tn_eff), jnp.float32)],
        ),
        compiler_params=pltpu.CompilerParams(
            dimension_semantics=("parallel", "parallel", "arbitrary"),
            vmem_limit_bytes=vmem_limit,
        ),
    )(x2d, w_cat, b_cat)

    out2d = out2d[:M, :n_hidden]
    return out2d.reshape(*lead, n_hidden)


if __name__ == "__main__":
    # Small shapes consistent with GLU(input_size, hidden_size) applied to
    # (batch, seq, input_size).  seq=10 deliberately exercises padding paths.
    batch, seq = 2, 10
    input_size, hidden_size = 64, 128

    key = jax.random.PRNGKey(0)
    kx, kw1, kb1, kw2, kb2 = jax.random.split(key, 5)

    x = jax.random.normal(kx, (batch, seq, input_size), dtype=jnp.float32)

    # PyTorch nn.Linear stores weight as (out, in); initialize in that
    # convention and transpose to (in, out) for the kernel.
    w1_torch = jax.random.normal(kw1, (hidden_size, input_size), dtype=jnp.float32) * 0.05
    b1 = jax.random.normal(kb1, (hidden_size,), dtype=jnp.float32) * 0.05
    w2_torch = jax.random.normal(kw2, (hidden_size, input_size), dtype=jnp.float32) * 0.05
    b2 = jax.random.normal(kb2, (hidden_size,), dtype=jnp.float32) * 0.05

    w1 = w1_torch.T  # (input_size, hidden_size)
    w2 = w2_torch.T  # (input_size, hidden_size)

    out = glu(x, w1, b1, w2, b2)
    out = jax.block_until_ready(out)

    # Pure-JAX reference (matches the PyTorch forward exactly).
    ref = jax.nn.sigmoid(jnp.dot(x, w1) + b1) * (jnp.dot(x, w2) + b2)
    assert out.shape == (batch, seq, hidden_size)
    assert jnp.allclose(out, ref, atol=1e-5, rtol=1e-5), float(jnp.max(jnp.abs(out - ref)))

    print("KERNEL_OK")
</pallas_src>

<mosaic_0001>
module attributes {stable_mosaic.version = 11 : i64} {
  func.func @_glu_kernel(%arg0: i32, %arg1: i32, %arg2: i32, %arg3: memref<24x128xf32, #tpu.memory_space<vmem>>, %arg4: memref<1x128x256xf32, #tpu.memory_space<vmem>>, %arg5: memref<1x1x256xf32, #tpu.memory_space<vmem>>, %arg6: memref<24x128xf32, #tpu.memory_space<vmem>>, %arg7: memref<24x256xf32, #tpu.memory_space<vmem>>) attributes {dimension_semantics = [#tpu.dimension_semantics<parallel>, #tpu.dimension_semantics<parallel>, #tpu.dimension_semantics<arbitrary>], iteration_bounds = array<i64: 1, 1, 1>, scalar_prefetch = 0 : i64, scratch_operands = 1 : i64, tpu.core_type = #tpu.core_type<tc>, window_params = [{transform_indices = @transform_0, window_bounds = array<i64: 24, 128>}, {transform_indices = @transform_1, window_bounds = array<i64: 1, 128, 256>}, {transform_indices = @transform_2, window_bounds = array<i64: 1, 1, 256>}, {transform_indices = @transform_3, window_bounds = array<i64: 24, 128>}]} {
    %c0_i32 = arith.constant 0 : i32
    %0 = arith.cmpi eq, %arg2, %c0_i32 : i32
    %1 = arith.extui %0 : i1 to i32
    %c0_i32_0 = arith.constant 0 : i32
    %2 = arith.cmpi ne, %1, %c0_i32_0 : i32
    scf.if %2 {
      %cst_11 = arith.constant 0.000000e+00 : f32
      %13 = vector.broadcast %cst_11 : f32 to vector<24x256xf32>
      %c0_12 = arith.constant 0 : index
      %c0_13 = arith.constant 0 : index
      %14 = vector.load %arg7[%c0_12, %c0_13] : memref<24x256xf32, #tpu.memory_space<vmem>>, vector<24x256xf32>
      tpu.vector_store %arg7[%c0_12, %c0_13], %13 {strides = array<i32>} : memref<24x256xf32, #tpu.memory_space<vmem>>, vector<24x256xf32>,
    } else {
    }
    %c0 = arith.constant 0 : index
    %c0_1 = arith.constant 0 : index
    %3 = vector.load %arg7[%c0, %c0_1] : memref<24x256xf32, #tpu.memory_space<vmem>>, vector<24x256xf32>
    %c0_2 = arith.constant 0 : index
    %c0_3 = arith.constant 0 : index
    %4 = vector.load %arg3[%c0_2, %c0_3] : memref<24x128xf32, #tpu.memory_space<vmem>>, vector<24x128xf32>
    %c0_4 = arith.constant 0 : index
    %c0_5 = arith.constant 0 : index
    %c0_6 = arith.constant 0 : index
    %5 = vector.load %arg4[%c0_4, %c0_5, %c0_6] : memref<1x128x256xf32, #tpu.memory_space<vmem>>, vector<1x128x256xf32>
    %6 = vector.shape_cast %5 : vector<1x128x256xf32> to vector<128x256xf32>
    %cst = arith.constant dense<0.000000e+00> : vector<24x256xf32>
    %7 = tpu.matmul %4, %6, %cst {dimension_numbers = #tpu.dot_dimension_numbers<[1], [0], [0], [1], [0, 0, 1, 1], [], []>} : vector<24x128xf32>, vector<128x256xf32>, vector<24x256xf32> -> vector<24x256xf32>
    %8 = arith.addf %3, %7 : vector<24x256xf32>
    %c0_7 = arith.constant 0 : index
    %c0_8 = arith.constant 0 : index
    %9 = vector.load %arg7[%c0_7, %c0_8] : memref<24x256xf32, #tpu.memory_space<vmem>>, vector<24x256xf32>
    tpu.vector_store %arg7[%c0_7, %c0_8], %8 {strides = array<i32>} : memref<24x256xf32, #tpu.memory_space<vmem>>, vector<24x256xf32>,
    %c0_i32_9 = arith.constant 0 : i32
    %10 = arith.cmpi eq, %arg2, %c0_i32_9 : i32
    %11 = arith.extui %10 : i1 to i32
    %c0_i32_10 = arith.constant 0 : i32
    %12 = arith.cmpi ne, %11, %c0_i32_10 : i32
    scf.if %12 {
      %c0_11 = arith.constant 0 : index
      %c0_12 = arith.constant 0 : index
      %13 = vector.load %arg7[%c0_11, %c0_12] : memref<24x256xf32, #tpu.memory_space<vmem>>, vector<24x256xf32>
      %c0_13 = arith.constant 0 : index
      %c0_14 = arith.constant 0 : index
      %c0_15 = arith.constant 0 : index
      %14 = vector.load %arg5[%c0_13, %c0_14, %c0_15] : memref<1x1x256xf32, #tpu.memory_space<vmem>>, vector<1x1x256xf32>
      %15 = vector.shape_cast %14 : vector<1x1x256xf32> to vector<1x256xf32>
      %16 = vector.broadcast %15 : vector<1x256xf32> to vector<24x256xf32>
      %17 = arith.addf %13, %16 : vector<24x256xf32>
      %18 = vector.extract_strided_slice %17 {offsets = [0, 0], sizes = [24, 128], strides = [1, 1]} : vector<24x256xf32> to vector<24x128xf32>
      %19 = vector.extract_strided_slice %17 {offsets = [0, 128], sizes = [24, 128], strides = [1, 1]} : vector<24x256xf32> to vector<24x128xf32>
      %20 = arith.negf %18 : vector<24x128xf32>
      %21 = math.exp %20 : vector<24x128xf32>
      %cst_16 = arith.constant 1.000000e+00 : f32
      %22 = vector.broadcast %cst_16 : f32 to vector<24x128xf32>
      %23 = arith.addf %22, %21 : vector<24x128xf32>
      %24 = arith.divf %22, %23 : vector<24x128xf32>
      %25 = arith.mulf %24, %19 : vector<24x128xf32>
      %c0_17 = arith.constant 0 : index
      %c0_18 = arith.constant 0 : index
      %26 = vector.load %arg6[%c0_17, %c0_18] : memref<24x128xf32, #tpu.memory_space<vmem>>, vector<24x128xf32>
      tpu.vector_store %arg6[%c0_17, %c0_18], %25 {strides = array<i32>} : memref<24x128xf32, #tpu.memory_space<vmem>>, vector<24x128xf32>,
    } else {
    }
    return
  }
  func.func @transform_0(%arg0: i32, %arg1: i32, %arg2: i32) -> (i32, i32) {
    %c0_i32 = arith.constant 0 : i32
    return %arg0, %arg2 : i32, i32
  }
  func.func @transform_1(%arg0: i32, %arg1: i32, %arg2: i32) -> (i32, i32, i32) {
    %c0_i32 = arith.constant 0 : i32
    %c0_i32_0 = arith.constant 0 : i32
    return %arg1, %arg2, %c0_i32 : i32, i32, i32
  }
  func.func @transform_2(%arg0: i32, %arg1: i32, %arg2: i32) -> (i32, i32, i32) {
    %c0_i32 = arith.constant 0 : i32
    %c0_i32_0 = arith.constant 0 : i32
    %c0_i32_1 = arith.constant 0 : i32
    return %arg1, %c0_i32, %c0_i32_0 : i32, i32, i32
  }
  func.func @transform_3(%arg0: i32, %arg1: i32, %arg2: i32) -> (i32, i32) {
    %c0_i32 = arith.constant 0 : i32
    return %arg0, %arg1 : i32, i32
  }
}

</mosaic_0001>

<llo_original>
// kernel: tpu_custom_call.1
$region0: #{tpu_custom_call.1}
  #allocation0 [shape = 'u32[]', space=smem, size = 0x4, offset = 0x4, fixed_abs, tag = 'smem constant byte address 0x4 - core index']
  #allocation1 [shape = 'u32[144,128]{1,0:T(1,128)}', space=vmem, size = 0x12000, scoped, tag = 'internal scratch']
  #allocation2 [shape = 'f32[24,256]{1,0:T(8,128)}', space=vmem, size = 0x6000, scoped, tag = 'scratch operand']
  %s0 = inlined_call_operand.hbm [shape: f32[24,128], index: 0, kind: input, shape index: {}]
  %s1 = inlined_call_operand.hbm [shape: f32[1,128,256], index: 1, kind: input, shape index: {}]
  %s2 = inlined_call_operand.vmem [shape: f32[1,1,256], index: 2, kind: input, shape index: {}]
  %s3 = inlined_call_operand.hbm [shape: f32[24,128], index: 3, kind: output, shape index: {}]
  %s4 = sld [smem:[#allocation0]]
  $region38: #{tpu_custom_call.1} parent=0
    _
  %s6 = ssub.s32 1, %s4
  %s7 = scalar_select 0, %s6, %s4
  $region1: #{tpu_custom_call.1} parent=0
    #allocation3 [shape = 'u8[12288]{0}', space=vmem, size = 0x3000, scoped, tag = 'input window, operand 0, single buffered']
    #allocation4 [shape = 's32[1]{0}', space=sflag, size = 0x4, scoped, tag = 'scoped memory for tpu_custom_call.1']
    #allocation5 [shape = 's32[1]{0}', space=sflag, size = 0x4, scoped, tag = 'scoped memory for tpu_custom_call.1']
    #allocation6 [shape = 'u8[131072]{0}', space=vmem, size = 0x20000, scoped, tag = 'input window, operand 1, single buffered']
    #allocation7 [shape = 's32[1]{0}', space=sflag, size = 0x4, scoped, tag = 'scoped memory for tpu_custom_call.1']
    #allocation8 [shape = 'u8[12288]{0}', space=vmem, size = 0x3000, scoped, tag = 'output window, operand 0, single buffered']
    %8 = vsyncpa [#allocation4], 0
    %9 = vsyncpa [#allocation7], 0
    %10 = vsyncpa [#allocation5], 0
    // Predicated region
    $region2: #{tpu_custom_call.1} parent=1 // pred_check
      _
    $region3: #{tpu_custom_call.1} parent=1 // pred_check_branch
      %12 = sbr.rel (0) target = $region5
    $region4: #{tpu_custom_call.1} parent=1 // pred_region
      %s14 = ssub.s32 384, 384
      %15 = vsyncadd [#allocation4], %s14
      %s16 = sshll.u32 [#allocation3], 4
      %s17 = int_to_ptr.vmem [resolvable:$true] %s16
      %22 = dma.hbm_to_vmem [thread:$0]  %s0, 384, %s17, [#allocation4], 128, 128, 8
    $region5: #{tpu_custom_call.1} parent=1 // pred_fallthru
      _
    // Predicated region
    $region6: #{tpu_custom_call.1} parent=1 // pred_check
      _
    $region7: #{tpu_custom_call.1} parent=1 // pred_check_branch
      %24 = sbr.rel (0) target = $region9
    $region8: #{tpu_custom_call.1} parent=1 // pred_region
      %s26 = ssub.s32 4096, 4096
      %27 = vsyncadd [#allocation7], %s26
      %s28 = sshll.u32 [#allocation6], 4
      %s29 = int_to_ptr.vmem [resolvable:$true] %s28
      %34 = dma.hbm_to_vmem [thread:$0]  %s1, 4096, %s29, [#allocation7], 256, 256, 16
    $region9: #{tpu_custom_call.1} parent=1 // pred_fallthru
      _
    // Predicated region
    $region10: #{tpu_custom_call.1} parent=1 // pred_check
      _
    $region11: #{tpu_custom_call.1} parent=1 // pred_check_branch
      %36 = sbr.rel (0) target = $region13
    $region12: #{tpu_custom_call.1} parent=1 // pred_region
      _
    $region13: #{tpu_custom_call.1} parent=1 // pred_fallthru
      _
    // Predicated region
    $region14: #{tpu_custom_call.1} parent=1 // pred_check
      _
    $region15: #{tpu_custom_call.1} parent=1 // pred_check_branch
      %38 = sbr.rel (0) target = $region17
    $region16: #{tpu_custom_call.1} parent=1 // pred_region
      %39 = dma.done [#allocation4], 384
    $region17: #{tpu_custom_call.1} parent=1 // pred_fallthru
      _
    // Predicated region
    $region18: #{tpu_custom_call.1} parent=1 // pred_check
      _
    $region19: #{tpu_custom_call.1} parent=1 // pred_check_branch
      %41 = sbr.rel (0) target = $region21
    $region20: #{tpu_custom_call.1} parent=1 // pred_region
      %42 = dma.done [#allocation7], 4096
    $region21: #{tpu_custom_call.1} parent=1 // pred_fallthru
      _
    %p43 = scmp.eq.s32.totalorder 0, 0
    // Predicated region
    $region22: #{tpu_custom_call.1} parent=1 // pred_check
      %p44 = pneg %p43
    $region23: #{tpu_custom_call.1} parent=1 // pred_check_branch
      %46 = sbr.rel (%p44) target = $region25
    $region24: #{tpu_custom_call.1} parent=1 // pred_region
      %47 = vst [vmem:[#allocation2] sm:$0xff] 0.0
      %48 = vst [vmem:[#allocation2 + $0x8] sm:$0xff] 0.0
      %49 = vst [vmem:[#allocation2 + $0x10] sm:$0xff] 0.0
      %50 = vst [vmem:[#allocation2 + $0x18] sm:$0xff] 0.0
      %51 = vst [vmem:[#allocation2 + $0x20] sm:$0xff] 0.0
      %52 = vst [vmem:[#allocation2 + $0x28] sm:$0xff] 0.0
    $region25: #{tpu_custom_call.1} parent=1 // pred_fallthru
      _
    %v53 = vld [vmem:[#allocation2] sm:$0xff]
    %v54 = vld [vmem:[#allocation2 + $0x8] sm:$0xff]
    %v55 = vld [vmem:[#allocation2 + $0x10] sm:$0xff]
    %v56 = vld [vmem:[#allocation2 + $0x18] sm:$0xff]
    %v57 = vld [vmem:[#allocation2 + $0x20] sm:$0xff]
    %v58 = vld [vmem:[#allocation2 + $0x28] sm:$0xff]
    %v59 = vld [vmem:[#allocation3] sm:$0xff]
    %v60 = vld [vmem:[#allocation3 + $0x8] sm:$0xff]
    %v61 = vld [vmem:[#allocation3 + $0x10] sm:$0xff]
    %v62 = vld [vmem:[#allocation6] sm:$0xff]
    %v63 = vld [vmem:[#allocation6 + $0x8] sm:$0xff]
    %v64 = vld [vmem:[#allocation6 + $0x10] sm:$0xff]
    %v65 = vld [vmem:[#allocation6 + $0x18] sm:$0xff]
    %v66 = vld [vmem:[#allocation6 + $0x20] sm:$0xff]
    %v67 = vld [vmem:[#allocation6 + $0x28] sm:$0xff]
    %v68 = vld [vmem:[#allocation6 + $0x30] sm:$0xff]
    %v69 = vld [vmem:[#allocation6 + $0x38] sm:$0xff]
    %v70 = vld [vmem:[#allocation6 + $0x40] sm:$0xff]
    %v71 = vld [vmem:[#allocation6 + $0x48] sm:$0xff]
    %v72 = vld [vmem:[#allocation6 + $0x50] sm:$0xff]
    %v73 = vld [vmem:[#allocation6 + $0x58] sm:$0xff]
    %v74 = vld [vmem:[#allocation6 + $0x60] sm:$0xff]
    %v75 = vld [vmem:[#allocation6 + $0x68] sm:$0xff]
    %v76 = vld [vmem:[#allocation6 + $0x70] sm:$0xff]
    %v77 = vld [vmem:[#allocation6 + $0x78] sm:$0xff]
    %v78 = vld [vmem:[#allocation6 + $0x80] sm:$0xff]
    %v79 = vld [vmem:[#allocation6 + $0x88] sm:$0xff]
    %v80 = vld [vmem:[#allocation6 + $0x90] sm:$0xff]
    %v81 = vld [vmem:[#allocation6 + $0x98] sm:$0xff]
    %v82 = vld [vmem:[#allocation6 + $0xa0] sm:$0xff]
    %v83 = vld [vmem:[#allocation6 + $0xa8] sm:$0xff]
    %v84 = vld [vmem:[#allocation6 + $0xb0] sm:$0xff]
    %v85 = vld [vmem:[#allocation6 + $0xb8] sm:$0xff]
    %v86 = vld [vmem:[#allocation6 + $0xc0] sm:$0xff]
    %v87 = vld [vmem:[#allocation6 + $0xc8] sm:$0xff]
    %v88 = vld [vmem:[#allocation6 + $0xd0] sm:$0xff]
    %v89 = vld [vmem:[#allocation6 + $0xd8] sm:$0xff]
    %v90 = vld [vmem:[#allocation6 + $0xe0] sm:$0xff]
    %v91 = vld [vmem:[#allocation6 + $0xe8] sm:$0xff]
    %v92 = vld [vmem:[#allocation6 + $0xf0] sm:$0xff]
    %v93 = vld [vmem:[#allocation6 + $0xf8] sm:$0xff]
    %94 = vmatprep.subr.mxu0 %v63
    %95 = vmatpush1.msra.mxu0 %v62
    %96 = vmatprep.subr.mxu0 %v65
    %97 = vmatpush1.msra.mxu0 %v64
    %98 = vmatprep.subr.mxu0 %v67
    %99 = vmatpush1.msra.mxu0 %v66
    %100 = vmatprep.subr.mxu0 %v69
    %101 = vmatpush1.msra.mxu0 %v68
    %102 = vmatprep.subr.mxu0 %v71
    %103 = vmatpush1.msra.mxu0 %v70
    %104 = vmatprep.subr.mxu0 %v73
    %105 = vmatpush1.msra.mxu0 %v72
    %106 = vmatprep.subr.mxu0 %v75
    %107 = vmatpush1.msra.mxu0 %v74
    %108 = vmatprep.subr.mxu0 %v77
    %109 = vmatpush1.msra.mxu0 %v76
    %110 = vmatprep.subr.mxu0 %v79
    %111 = vmatpush1.msra.mxu0 %v78
    %112 = vmatprep.subr.mxu0 %v81
    %113 = vmatpush1.msra.mxu0 %v80
    %114 = vmatprep.subr.mxu0 %v83
    %115 = vmatpush1.msra.mxu0 %v82
    %116 = vmatprep.subr.mxu0 %v85
    %117 = vmatpush1.msra.mxu0 %v84
    %118 = vmatprep.subr.mxu0 %v87
    %119 = vmatpush1.msra.mxu0 %v86
    %120 = vmatprep.subr.mxu0 %v89
    %121 = vmatpush1.msra.mxu0 %v88
    %122 = vmatprep.subr.mxu0 %v91
    %123 = vmatpush1.msra.mxu0 %v90
    %124 = vmatprep.subr.mxu0 %v93
    %125 = vmatpush1.msra.mxu0 %v92
    %126 = vmatprep.subr.mxu0 0.0
    %127 = vmatpush1.msra.mxu0 0.0
    %128 = vmatprep.subr.mxu0 0.0
    %129 = vmatpush1.msra.mxu0 0.0
    %130 = vmatprep.subr.mxu0 0.0
    %131 = vmatpush1.msra.mxu0 0.0
    %132 = vmatprep.subr.mxu0 0.0
    %133 = vmatpush1.msra.mxu0 0.0
    %134 = vmatprep.subr.mxu0 0.0
    %135 = vmatpush1.msra.mxu0 0.0
    %136 = vmatprep.subr.mxu0 0.0
    %137 = vmatpush1.msra.mxu0 0.0
    %138 = vmatprep.subr.mxu0 0.0
    %139 = vmatpush1.msra.mxu0 0.0
    %140 = vmatprep.subr.mxu0 0.0
    %141 = vmatpush1.msra.mxu0 0.0
    %142 = vmatprep.subr.mxu0 0.0
    %143 = vmatpush1.msra.mxu0 0.0
    %144 = vmatprep.subr.mxu0 0.0
    %145 = vmatpush1.msra.mxu0 0.0
    %146 = vmatprep.subr.mxu0 0.0
    %147 = vmatpush1.msra.mxu0 0.0
    %148 = vmatprep.subr.mxu0 0.0
    %149 = vmatpush1.msra.mxu0 0.0
    %150 = vmatprep.subr.mxu0 0.0
    %151 = vmatpush1.msra.mxu0 0.0
    %152 = vmatprep.subr.mxu0 0.0
    %153 = vmatpush1.msra.mxu0 0.0
    %154 = vmatprep.subr.mxu0 0.0
    %155 = vmatpush1.msra.mxu0 0.0
    %156 = vmatprep.subr.mxu0 0.0
    %157 = vmatpush1.msra.mxu0 0.0
    %158 = vmatprep.mubr.f32.mxu0 0.0
    %159 = vmatmul.mubr.f32.gmra.mrb[0].mxu0 %v59
    %v160 = vpop.f32.mrb[0].mxu0
    %v161 = vadd.f32 0.0, %v160
    %v162 = vpop.f32.mrb[0].mxu0
    %v163 = vadd.f32 0.0, %v162
    %164 = vmatprep.mubr.f32.mxu0 0.0
    %165 = vmatmul.mubr.f32.gmra.mrb[0].mxu0 %v60
    %v166 = vpop.f32.mrb[0].mxu0
    %v167 = vadd.f32 0.0, %v166
    %v168 = vpop.f32.mrb[0].mxu0
    %v169 = vadd.f32 0.0, %v168
    %170 = vmatprep.mubr.f32.mxu0 0.0
    %171 = vmatmul.mubr.f32.gmra.mrb[0].mxu0 %v61
    %v172 = vpop.f32.mrb[0].mxu0
    %v173 = vadd.f32 0.0, %v172
    %v174 = vpop.f32.mrb[0].mxu0
    %v175 = vadd.f32 0.0, %v174
    %176 = vdwg.mxu0
    %v177 = vadd.f32 %v53, %v161
    %v178 = vadd.f32 %v54, %v163
    %v179 = vadd.f32 %v55, %v167
    %v180 = vadd.f32 %v56, %v169
    %v181 = vadd.f32 %v57, %v173
    %v182 = vadd.f32 %v58, %v175
    %183 = vst [vmem:[#allocation2] sm:$0xff] %v177
    %184 = vst [vmem:[#allocation2 + $0x8] sm:$0xff] %v178
    %185 = vst [vmem:[#allocation2 + $0x10] sm:$0xff] %v179
    %186 = vst [vmem:[#allocation2 + $0x18] sm:$0xff] %v180
    %187 = vst [vmem:[#allocation2 + $0x20] sm:$0xff] %v181
    %188 = vst [vmem:[#allocation2 + $0x28] sm:$0xff] %v182
    // Predicated region
    $region26: #{tpu_custom_call.1} parent=1 // pred_check
      %p189 = pneg %p43
    $region27: #{tpu_custom_call.1} parent=1 // pred_check_branch
      %191 = sbr.rel (%p189) target = $region29
    $region28: #{tpu_custom_call.1} parent=1 // pred_region
      %v192 = vld [vmem:[#allocation2] sm:$0xff]
      %v193 = vld [vmem:[#allocation2 + $0x8] sm:$0xff]
      %v194 = vld [vmem:[#allocation2 + $0x10] sm:$0xff]
      %v195 = vld [vmem:[#allocation2 + $0x18] sm:$0xff]
      %v196 = vld [vmem:[#allocation2 + $0x20] sm:$0xff]
      %v197 = vld [vmem:[#allocation2 + $0x28] sm:$0xff]
      %v198 = vld [vmem:[%s2] sm:$0x3]
      %v200 = vlaneseq
      %v201 = vshrl.u32 %v200, 7
      %v202 = vsub.s32 0, %v201
      %v203 = vrot.slane %v198, %v202
      %v204 = vlaneseq
      %v205 = vshrl.u32 %v204, 7
      %v206 = vsub.s32 1, %v205
      %v207 = vrot.slane %v198, %v206
      %v210 = vadd.f32 %v192, %v203
      %v211 = vadd.f32 %v193, %v207
      %v212 = vadd.f32 %v194, %v203
      %v213 = vadd.f32 %v195, %v207
      %v214 = vadd.f32 %v196, %v203
      %v215 = vadd.f32 %v197, %v207
      %v216 = vxor.u32 %v210, 2147483648
      %v217 = vxor.u32 %v212, 2147483648
      %v218 = vxor.u32 %v214, 2147483648
      %v219 = vmul.f32 %v216, 1.442695
      %v220 = vpow.pop %v219
      %v221 = vmul.f32 %v217, 1.442695
      %v222 = vpow.pop %v221
      %v223 = vmul.f32 %v218, 1.442695
      %v224 = vpow.pop %v223
      %v225 = vadd.f32 %v220, 1.0
      %v226 = vadd.f32 %v222, 1.0
      %v227 = vadd.f32 %v224, 1.0
      %v228 = vrcp.pop %v225
      %v229 = vmul.f32 1.0, %v228
      %v230 = vrcp.pop %v226
      %v231 = vmul.f32 1.0, %v230
      %v232 = vrcp.pop %v227
      %v233 = vmul.f32 1.0, %v232
      %v234 = vmul.f32 %v229, %v211
      %v235 = vmul.f32 %v231, %v213
      %v236 = vmul.f32 %v233, %v215
      %237 = vst [vmem:[#allocation8] sm:$0xff] %v234
      %238 = vst [vmem:[#allocation8 + $0x8] sm:$0xff] %v235
      %239 = vst [vmem:[#allocation8 + $0x10] sm:$0xff] %v236
    $region29: #{tpu_custom_call.1} parent=1 // pred_fallthru
      _
    // Predicated region
    $region30: #{tpu_custom_call.1} parent=1 // pred_check
      _
    $region31: #{tpu_custom_call.1} parent=1 // pred_check_branch
      %241 = sbr.rel (0) target = $region33
    $region32: #{tpu_custom_call.1} parent=1 // pred_region
      %s243 = ssub.s32 384, 384
      %244 = vsyncadd [#allocation5], %s243
      %s245 = sshll.u32 [#allocation8], 4
      %s246 = int_to_ptr.vmem [resolvable:$true] %s245
      %251 = dma.vmem_to_hbm [thread:$0]  %s246, 384, %s3, [#allocation5], 128, 128, 8
    $region33: #{tpu_custom_call.1} parent=1 // pred_fallthru
      _
    // Predicated region
    $region34: #{tpu_custom_call.1} parent=1 // pred_check
      _
    $region35: #{tpu_custom_call.1} parent=1 // pred_check_branch
      %253 = sbr.rel (0) target = $region37
    $region36: #{tpu_custom_call.1} parent=1 // pred_region
      %254 = dma.done [#allocation5], 384
    $region37: #{tpu_custom_call.1} parent=1 // pred_fallthru
      _
    %255 = vsyncpa [#allocation4], 1
    %256 = vsyncpa [#allocation7], 1
    %257 = vsyncpa [#allocation5], 1

</llo_original>
